<compile_context>
chip_gen: v7x
topology: tpu7x:2x2x1
jax: 0.10.0
libtpu: 0.0.40
codegen_flags: <defaults>
</compile_context>

<pallas_src>
import jax
import jax.numpy as jnp
from jax.experimental import pallas as pl
from jax.experimental.pallas import tpu as pltpu

LANES = 128                  # vreg lane width; last dim of every block
MAX_TILE_ROWS = 4096         # 4096 x 128 x 4 B = 2 MiB f32 per block
MIN_PALLAS_ELEMS = 131072    # ~512 KiB f32; below this XLA's fused x*w+b wins


def _round_up(a, m):
    return ((a + m - 1) // m) * m


def _linear_kernel(params_ref, x_ref, o_ref):
    # params_ref: (2,) f32 in SMEM = [weight, bias]. in/out features are 1, so
    # the "matmul" degenerates to an elementwise scale + bias on the VPU, fully
    # hidden under the HBM<->VMEM streaming DMA.
    w = params_ref[0]
    b = params_ref[1]
    o_ref[...] = x_ref[...] * w + b


def _linear_forward_pallas(x, weight, bias):
    """x: (N, 1) f32 with N % 128 == 0 -> (N, 1) f32 via a zero-copy slab view."""
    n = x.shape[0]
    dtype = x.dtype
    rows = n // LANES

    # Lane-dense slab view: (N, 1) -> (rows, 128) is a bitcast of the same
    # contiguous buffer (no pad, no copy).
    x_slab = x.reshape(rows, LANES)

    # Tile as large as possible (up to 2 MiB) while keeping >= 2 grid steps so
    # the "parallel" axis can split across v7x's two TensorCores.  The last
    # block may be partial; Pallas masks it.
    tile_rows = max(8, min(MAX_TILE_ROWS, _round_up(pl.cdiv(rows, 2), 8)))
    grid = (pl.cdiv(rows, tile_rows),)

    # Single 1-D scalar operand for the parameters (tiny SMEM footprint).
    params = jnp.concatenate([weight.reshape(-1), bias.reshape(-1)]).astype(dtype)

    out_slab = pl.pallas_call(
        _linear_kernel,
        out_shape=jax.ShapeDtypeStruct((rows, LANES), dtype),
        grid=grid,
        in_specs=[
            pl.BlockSpec((2,), lambda i: (0,), memory_space=pltpu.SMEM),   # [w, b]
            pl.BlockSpec((tile_rows, LANES), lambda i: (i, 0)),            # x tile
        ],
        out_specs=pl.BlockSpec((tile_rows, LANES), lambda i: (i, 0)),
        compiler_params=pltpu.CompilerParams(
            dimension_semantics=("parallel",),       # v7x: shard rows over 2 TCs
            vmem_limit_bytes=32 * 1024 * 1024,       # safe on v5e/v6e/v7x
        ),
    )(params, x_slab)

    # (rows, 128) -> (N, 1): again a pure bitcast reshape, no slice.
    return out_slab.reshape(n, 1)


def linear_forward(x, weight, bias, *, min_pallas_elems=MIN_PALLAS_ELEMS):
    """Forward pass of LinearModel.  x: (N, 1), weight: (1, 1), bias: (1,)."""
    n, f = x.shape
    assert f == 1 and weight.shape == (1, 1) and bias.shape == (1,)
    if n < min_pallas_elems or n % LANES != 0:
        # Small batches (launch/DMA setup dwarfs a handful of FMAs) and ragged N
        # (which would need an extra pad/slice or concat pass, i.e. >=3x the
        # minimal HBM traffic vs. XLA's fused 2-pass x*w+b) stay on XLA.
        # TODO(synk): a manual-DMA (memory_space=pl.ANY) path could stream a
        # ragged N with zero extra copies; unnecessary for this toy model.
        return x * weight[0, 0] + bias[0]
    return _linear_forward_pallas(x, weight, bias)


if __name__ == "__main__":
    key = jax.random.PRNGKey(0)
    kx, kw, kb, kx2, kx3 = jax.random.split(key, 5)

    # torch.nn.Linear(1, 1): weight (out_features, in_features) = (1, 1),
    # bias (out_features,) = (1,).
    weight = jax.random.uniform(kw, (1, 1), jnp.float32, minval=-1.0, maxval=1.0)
    bias = jax.random.uniform(kb, (1,), jnp.float32, minval=-1.0, maxval=1.0)

    # Pallas streaming path: N is a multiple of 128 (zero-copy slab view) but
    # rows (1531) is NOT a multiple of the tile (768), exercising a 2-step
    # "parallel" grid with a partial, masked last block.
    n_big = 1531 * LANES   # 195968 rows, ~768 KiB of f32
    x_big = jax.random.normal(kx, (n_big, 1), jnp.float32)
    y_big = jax.block_until_ready(linear_forward(x_big, weight, bias))
    y_big_ref = x_big @ weight.T + bias
    assert y_big.shape == (n_big, 1)
    assert jnp.allclose(y_big, y_big_ref, atol=1e-5, rtol=1e-5)

    # Tiny batch like the original PyTorch toy example -> fused XLA fast path.
    x_small = jax.random.normal(kx2, (8, 1), jnp.float32)
    y_small = jax.block_until_ready(linear_forward(x_small, weight, bias))
    assert y_small.shape == (8, 1)
    assert jnp.allclose(y_small, x_small @ weight.T + bias, atol=1e-6, rtol=1e-6)

    # Ragged mid-size batch (not a multiple of 128) -> XLA path, routing check.
    x_ragged = jax.random.normal(kx3, (70_007, 1), jnp.float32)
    y_ragged = jax.block_until_ready(linear_forward(x_ragged, weight, bias))
    assert y_ragged.shape == (70_007, 1)
    assert jnp.allclose(y_ragged, x_ragged @ weight.T + bias, atol=1e-5, rtol=1e-5)

    print("KERNEL_OK")
</pallas_src>

<mosaic_0001>
module attributes {stable_mosaic.version = 11 : i64} {
  func.func @_linear_kernel(%arg0: i32, %arg1: memref<2xf32, #tpu.memory_space<smem>>, %arg2: memref<768x128xf32, #tpu.memory_space<vmem>>, %arg3: memref<768x128xf32, #tpu.memory_space<vmem>>) attributes {dimension_semantics = [#tpu.dimension_semantics<parallel>], iteration_bounds = array<i64: 2>, scalar_prefetch = 0 : i64, scratch_operands = 0 : i64, tpu.core_type = #tpu.core_type<tc>, window_params = [{transform_indices = @transform_0, window_bounds = array<i64: 2>}, {transform_indices = @transform_1, window_bounds = array<i64: 768, 128>}, {transform_indices = @transform_2, window_bounds = array<i64: 768, 128>}]} {
    %c0 = arith.constant 0 : index
    %0 = memref.load %arg1[%c0] : memref<2xf32, #tpu.memory_space<smem>>
    %c1 = arith.constant 1 : index
    %1 = memref.load %arg1[%c1] : memref<2xf32, #tpu.memory_space<smem>>
    %c0_0 = arith.constant 0 : index
    %c0_1 = arith.constant 0 : index
    %2 = vector.load %arg2[%c0_0, %c0_1] : memref<768x128xf32, #tpu.memory_space<vmem>>, vector<768x128xf32>
    %3 = vector.broadcast %0 : f32 to vector<768x128xf32>
    %4 = arith.mulf %2, %3 : vector<768x128xf32>
    %5 = vector.broadcast %1 : f32 to vector<768x128xf32>
    %6 = arith.addf %4, %5 : vector<768x128xf32>
    %c0_2 = arith.constant 0 : index
    %c0_3 = arith.constant 0 : index
    %7 = vector.load %arg3[%c0_2, %c0_3] : memref<768x128xf32, #tpu.memory_space<vmem>>, vector<768x128xf32>
    tpu.vector_store %arg3[%c0_2, %c0_3], %6 {strides = array<i32>} : memref<768x128xf32, #tpu.memory_space<vmem>>, vector<768x128xf32>,
    return
  }
  func.func @transform_0(%arg0: i32) -> i32 {
    %c0_i32 = arith.constant 0 : i32
    %c0_i32_0 = arith.constant 0 : i32
    return %c0_i32 : i32
  }
  func.func @transform_1(%arg0: i32) -> (i32, i32) {
    %c0_i32 = arith.constant 0 : i32
    %c0_i32_0 = arith.constant 0 : i32
    return %arg0, %c0_i32 : i32, i32
  }
  func.func @transform_2(%arg0: i32) -> (i32, i32) {
    %c0_i32 = arith.constant 0 : i32
    %c0_i32_0 = arith.constant 0 : i32
    return %arg0, %c0_i32 : i32, i32
  }
}

</mosaic_0001>

<llo_original>
// kernel: tpu_custom_call.1
$region0: #{tpu_custom_call.1}
  #allocation0 [shape = 'u32[]', space=smem, size = 0x4, offset = 0x4, fixed_abs, tag = 'smem constant byte address 0x4 - core index']
  #allocation1 [shape = 'u32[144,128]{1,0:T(1,128)}', space=vmem, size = 0x12000, scoped, tag = 'internal scratch']
  %s0 = inlined_call_operand.hbm [shape: f32[2], index: 0, kind: input, shape index: {}]
  %s1 = inlined_call_operand.hbm [shape: f32[1531,128], index: 1, kind: input, shape index: {}]
  %s2 = inlined_call_operand.hbm [shape: f32[1531,128], index: 2, kind: output, shape index: {}]
  %s3 = sld [smem:[#allocation0]]
  $region49: #{tpu_custom_call.1} parent=0
    _
  %s5 = ssub.s32 1, %s3
  %s6 = scalar_select 0, %s5, %s3
  $region1: #{tpu_custom_call.1} parent=0
    #allocation2 [shape = 'u8[512]{0}', space=smem, size = 0x200, scoped, tag = 'input window, operand 0, single buffered']
    #allocation3 [shape = 's32[2]{0}', space=sflag, size = 0x8, scoped, tag = 'scoped memory for tpu_custom_call.1']
    #allocation4 [shape = 's32[2]{0}', space=sflag, size = 0x8, scoped, tag = 'scoped memory for tpu_custom_call.1']
    #allocation5 [shape = 's32[2]{0}', space=sflag, size = 0x8, scoped, tag = 'scoped memory for tpu_custom_call.1']
    #allocation6 [shape = 'u8[786432]{0}', space=vmem, size = 0xc0000, scoped, tag = 'input window, operand 1']
    #allocation7 [shape = 'u8[786432]{0}', space=vmem, size = 0xc0000, scoped, tag = 'output window, operand 0']
    %7 = vsyncpa [#allocation5], 0
    %8 = vsyncpa [#allocation3], 0
    %s9 = scalar_lea.sflag [#allocation3], 1
    %10 = vsyncpa %s9, 0
    %11 = vsyncpa [#allocation4], 0
    %s12 = scalar_lea.sflag [#allocation4], 1
    %13 = vsyncpa %s12, 0
    loop: start=0, step=1, limit=4
    $region2: #{tpu_custom_call.1} parent=1 // loop_pre_header
      _
    $region3: #{tpu_custom_call.1} parent=1 // loop_header
      %s15 = sphi 0, %s19
      %p16 = scmp.ge.s32.totalorder %s15, 4
      %s23 = sphi 0, %s23
      %s25 = sphi 0, %s23
      %s26 = sphi 0, %s25
      %s40 = sphi 0, %s26
      %s46 = sphi 0, %s48
      %s49 = sphi 0, %s46
      %s50 = sphi 0, %s49
      %s66 = sphi 0, %s50
      %s72 = sphi 0, %s74
      %s75 = sphi 0, %s72
      %s76 = sphi 0, %s75
      %s92 = sphi 0, %s76
    $region4: #{tpu_custom_call.1} parent=1 // loop_header_branch
      %18 = sbr.rel (%p16) target = $region8
    $region5: #{tpu_custom_call.1} parent=1 // loop_body
      %s20 = ssub.s32 %s15, 1
      %s21 = ssub.s32 %s15, 2
      %s22 = sadd.s32 %s15, 1
      %s24 = sadd.s32 %s23, 1
      %p27 = scmp.eq.s32.totalorder %s15, 1
      %p28 = scmp.ne.s32.totalorder %s23, %s25
      %p29 = scmp.eq.s32.totalorder %s15, 0
      %p30 = por %p28, %p29
      %p31 = scmp.ne.s32.totalorder %s23, %s25
      %p32 = scmp.eq.s32.totalorder %s20, 1
      %p33 = por %p31, %p32
      %p34 = scmp.ne.s32.totalorder %s25, %s26
      %p35 = scmp.eq.s32.totalorder %s20, 0
      %p36 = por %p34, %p35
      %p37 = scmp.ne.s32.totalorder %s25, %s26
      %p38 = scmp.eq.s32.totalorder %s21, 1
      %p39 = por %p37, %p38
      %p41 = scmp.ne.s32.totalorder %s26, %s40
      %p42 = scmp.eq.s32.totalorder %s21, 0
      %p43 = por %p41, %p42
      %s44 = ssub.s32 %s15, %s22
      %p45 = scmp.eq.s32.totalorder %s44, 0
      %s47 = sadd.s32 %s46, 1
      %s48 = scalar_select %p45, %s46, %s47
      %p51 = pneg %p45
      %p52 = scmp.eq.s32.totalorder %s15, 1
      %p53 = por %p51, %p52
      %p54 = scmp.ne.s32.totalorder %s46, %s49
      %p55 = scmp.eq.s32.totalorder %s15, 0
      %p56 = por %p54, %p55
      %p57 = scmp.ne.s32.totalorder %s46, %s49
      %p58 = scmp.eq.s32.totalorder %s20, 1
      %p59 = por %p57, %p58
      %p60 = scmp.ne.s32.totalorder %s49, %s50
      %p61 = scmp.eq.s32.totalorder %s20, 0
      %p62 = por %p60, %p61
      %p63 = scmp.ne.s32.totalorder %s49, %s50
      %p64 = scmp.eq.s32.totalorder %s21, 1
      %p65 = por %p63, %p64
      %p67 = scmp.ne.s32.totalorder %s50, %s66
      %p68 = scmp.eq.s32.totalorder %s21, 0
      %p69 = por %p67, %p68
      %s70 = ssub.s32 %s15, %s22
      %p71 = scmp.eq.s32.totalorder %s70, 0
      %s73 = sadd.s32 %s72, 1
      %s74 = scalar_select %p71, %s72, %s73
      %p77 = pneg %p71
      %p78 = scmp.eq.s32.totalorder %s15, 1
      %p79 = por %p77, %p78
      %p80 = scmp.ne.s32.totalorder %s72, %s75
      %p81 = scmp.eq.s32.totalorder %s15, 0
      %p82 = por %p80, %p81
      %p83 = scmp.ne.s32.totalorder %s72, %s75
      %p84 = scmp.eq.s32.totalorder %s20, 1
      %p85 = por %p83, %p84
      %p86 = scmp.ne.s32.totalorder %s75, %s76
      %p87 = scmp.eq.s32.totalorder %s20, 0
      %p88 = por %p86, %p87
      %p89 = scmp.ne.s32.totalorder %s75, %s76
      %p90 = scmp.eq.s32.totalorder %s21, 1
      %p91 = por %p89, %p90
      %p93 = scmp.ne.s32.totalorder %s76, %s92
      %p94 = scmp.eq.s32.totalorder %s21, 0
      %p95 = por %p93, %p94
      %p96 = scmp.le.s32.totalorder 1, %s15
      %p97 = scmp.lt.s32.totalorder %s15, 3
      %p98 = pnand %p96, %p97
      %p99 = pneg %p98
      // Predicated region
      $region9: #{tpu_custom_call.1} parent=5 // pred_check
        _
      $region10: #{tpu_custom_call.1} parent=5 // pred_check_branch
        %101 = sbr.rel (%p98) target = $region12
      $region11: #{tpu_custom_call.1} parent=5 // pred_region
        %s102 = ssub.s32 %s15, 1
        // Predicated region
        $region13: #{tpu_custom_call.1} parent=11 // pred_check
          %p103 = pneg %p36
        $region14: #{tpu_custom_call.1} parent=11 // pred_check_branch
          %105 = sbr.rel (%p103) target = $region16
        $region15: #{tpu_custom_call.1} parent=11 // pred_region
          %s107 = ssub.s32 16, 16
          %108 = vsyncadd [#allocation5], %s107
          %111 = dma.hbm_to_smem %s0, 16, [#allocation2], [#allocation5]
        $region16: #{tpu_custom_call.1} parent=11 // pred_fallthru
          _
      $region12: #{tpu_custom_call.1} parent=5 // pred_fallthru
        _
      %p112 = scmp.lt.s32.totalorder %s15, 2
      // Predicated region
      $region17: #{tpu_custom_call.1} parent=5 // pred_check
        %p113 = pneg %p112
      $region18: #{tpu_custom_call.1} parent=5 // pred_check_branch
        %115 = sbr.rel (%p113) target = $region20
      $region19: #{tpu_custom_call.1} parent=5 // pred_region
        // Predicated region
        $region21: #{tpu_custom_call.1} parent=19 // pred_check
          %p116 = pneg %p56
        $region22: #{tpu_custom_call.1} parent=19 // pred_check_branch
          %118 = sbr.rel (%p116) target = $region24
        $region23: #{tpu_custom_call.1} parent=19 // pred_region
          %s119 = sand.u32 %s46, 1
          %s120 = scalar_lea.sflag [#allocation3], %s119
          %s121 = sand.u32 %s46, 1
          %s122 = smul.addr %s121, 768
          %s123 = scalar_lea.vmem [#allocation6], %s122
          %s124 = smul.u32 96, %s15
          %s126 = ssub.s32 12288, 12288
          %127 = vsyncadd %s120, %s126
          %s128 = smul.addr %s124, 128
          %s129 = scalar_lea.hbm %s1, %s128
          %s130 = sshll.u32 %s123, 4
          %s131 = int_to_ptr.vmem [resolvable:$true] %s130
          %136 = dma.hbm_to_vmem [thread:$0]  %s129, 12288, %s131, %s120, 128, 128, 8
        $region24: #{tpu_custom_call.1} parent=19 // pred_fallthru
          _
      $region20: #{tpu_custom_call.1} parent=5 // pred_fallthru
        _
      %p137 = scmp.le.s32.totalorder 1, %s15
      %p138 = scmp.lt.s32.totalorder %s15, 3
      %p139 = pnand %p137, %p138
      %p140 = pneg %p139
      // Predicated region
      $region25: #{tpu_custom_call.1} parent=5 // pred_check
        _
      $region26: #{tpu_custom_call.1} parent=5 // pred_check_branch
        %142 = sbr.rel (%p139) target = $region28
      $region27: #{tpu_custom_call.1} parent=5 // pred_region
        %s143 = ssub.s32 %s15, 1
        // Predicated region
        $region29: #{tpu_custom_call.1} parent=27 // pred_check
          %p144 = pneg %p36
        $region30: #{tpu_custom_call.1} parent=27 // pred_check_branch
          %146 = sbr.rel (%p144) target = $region32
        $region31: #{tpu_custom_call.1} parent=27 // pred_region
          %147 = dma.done [#allocation5], 16
        $region32: #{tpu_custom_call.1} parent=27 // pred_fallthru
          _
        %s148 = sand.u32 %s49, 1
        %s149 = scalar_lea.sflag [#allocation3], %s148
        %s150 = sand.u32 %s49, 1
        %s151 = smul.addr %s150, 768
        %s152 = scalar_lea.vmem [#allocation6], %s151
        // Predicated region
        $region33: #{tpu_custom_call.1} parent=27 // pred_check
          %p153 = pneg %p62
        $region34: #{tpu_custom_call.1} parent=27 // pred_check_branch
          %155 = sbr.rel (%p153) target = $region36
        $region35: #{tpu_custom_call.1} parent=27 // pred_region
          %156 = dma.done %s149, 12288
        $region36: #{tpu_custom_call.1} parent=27 // pred_fallthru
          _
        %157 = sfence
        %p158 = pneg %p36
        %p159 = pneg %p33
        %s160 = sand.u32 %s49, 1
        %s161 = scalar_lea.sflag [#allocation3], %s160
        %s162 = sand.u32 %s49, 1
        %s163 = smul.addr %s162, 768
        %s164 = scalar_lea.vmem [#allocation6], %s163
        %p165 = pneg %p62
        %p166 = pneg %p59
        %p167 = pneg %p88
        %p168 = pneg %p85
        %s169 = sand.u32 %s75, 1
        %s170 = scalar_lea.sflag [#allocation4], %s169
        %s171 = sand.u32 %s75, 1
        %s172 = smul.addr %s171, 768
        %s173 = scalar_lea.vmem [#allocation7], %s172
        %s174 = smul.u32 96, %s20
        %s175 = smul.u32 96, %s20
        %s176 = sld [smem:[#allocation2]]
        %s177 = sld [smem:[#allocation2 + $0x1]]
        %v178 = vld [vmem:[%s152] sm:$0xff]
        %v179 = vld [vmem:[%s152 + $0x8] sm:$0xff]
        %v180 = vld [vmem:[%s152 + $0x10] sm:$0xff]
        %v181 = vld [vmem:[%s152 + $0x18] sm:$0xff]
        %v182 = vld [vmem:[%s152 + $0x20] sm:$0xff]
        %v183 = vld [vmem:[%s152 + $0x28] sm:$0xff]
        %v184 = vld [vmem:[%s152 + $0x30] sm:$0xff]
        %v185 = vld [vmem:[%s152 + $0x38] sm:$0xff]
        %v186 = vld [vmem:[%s152 + $0x40] sm:$0xff]
        %v187 = vld [vmem:[%s152 + $0x48] sm:$0xff]
        %v188 = vld [vmem:[%s152 + $0x50] sm:$0xff]
        %v189 = vld [vmem:[%s152 + $0x58] sm:$0xff]
        %v190 = vld [vmem:[%s152 + $0x60] sm:$0xff]
        %v191 = vld [vmem:[%s152 + $0x68] sm:$0xff]
        %v192 = vld [vmem:[%s152 + $0x70] sm:$0xff]
        %v193 = vld [vmem:[%s152 + $0x78] sm:$0xff]
        %v194 = vld [vmem:[%s152 + $0x80] sm:$0xff]
        %v195 = vld [vmem:[%s152 + $0x88] sm:$0xff]
        %v196 = vld [vmem:[%s152 + $0x90] sm:$0xff]
        %v197 = vld [vmem:[%s152 + $0x98] sm:$0xff]
        %v198 = vld [vmem:[%s152 + $0xa0] sm:$0xff]
        %v199 = vld [vmem:[%s152 + $0xa8] sm:$0xff]
        %v200 = vld [vmem:[%s152 + $0xb0] sm:$0xff]
        %v201 = vld [vmem:[%s152 + $0xb8] sm:$0xff]
        %v202 = vld [vmem:[%s152 + $0xc0] sm:$0xff]
        %v203 = vld [vmem:[%s152 + $0xc8] sm:$0xff]
        %v204 = vld [vmem:[%s152 + $0xd0] sm:$0xff]
        %v205 = vld [vmem:[%s152 + $0xd8] sm:$0xff]
        %v206 = vld [vmem:[%s152 + $0xe0] sm:$0xff]
        %v207 = vld [vmem:[%s152 + $0xe8] sm:$0xff]
        %v208 = vld [vmem:[%s152 + $0xf0] sm:$0xff]
        %v209 = vld [vmem:[%s152 + $0xf8] sm:$0xff]
        %v210 = vld [vmem:[%s152 + $0x100] sm:$0xff]
        %v211 = vld [vmem:[%s152 + $0x108] sm:$0xff]
        %v212 = vld [vmem:[%s152 + $0x110] sm:$0xff]
        %v213 = vld [vmem:[%s152 + $0x118] sm:$0xff]
        %v214 = vld [vmem:[%s152 + $0x120] sm:$0xff]
        %v215 = vld [vmem:[%s152 + $0x128] sm:$0xff]
        %v216 = vld [vmem:[%s152 + $0x130] sm:$0xff]
        %v217 = vld [vmem:[%s152 + $0x138] sm:$0xff]
        %v218 = vld [vmem:[%s152 + $0x140] sm:$0xff]
        %v219 = vld [vmem:[%s152 + $0x148] sm:$0xff]
        %v220 = vld [vmem:[%s152 + $0x150] sm:$0xff]
        %v221 = vld [vmem:[%s152 + $0x158] sm:$0xff]
        %v222 = vld [vmem:[%s152 + $0x160] sm:$0xff]
        %v223 = vld [vmem:[%s152 + $0x168] sm:$0xff]
        %v224 = vld [vmem:[%s152 + $0x170] sm:$0xff]
        %v225 = vld [vmem:[%s152 + $0x178] sm:$0xff]
        %v226 = vld [vmem:[%s152 + $0x180] sm:$0xff]
        %v227 = vld [vmem:[%s152 + $0x188] sm:$0xff]
        %v228 = vld [vmem:[%s152 + $0x190] sm:$0xff]
        %v229 = vld [vmem:[%s152 + $0x198] sm:$0xff]
        %v230 = vld [vmem:[%s152 + $0x1a0] sm:$0xff]
        %v231 = vld [vmem:[%s152 + $0x1a8] sm:$0xff]
        %v232 = vld [vmem:[%s152 + $0x1b0] sm:$0xff]
        %v233 = vld [vmem:[%s152 + $0x1b8] sm:$0xff]
        %v234 = vld [vmem:[%s152 + $0x1c0] sm:$0xff]
        %v235 = vld [vmem:[%s152 + $0x1c8] sm:$0xff]
        %v236 = vld [vmem:[%s152 + $0x1d0] sm:$0xff]
        %v237 = vld [vmem:[%s152 + $0x1d8] sm:$0xff]
        %v238 = vld [vmem:[%s152 + $0x1e0] sm:$0xff]
        %v239 = vld [vmem:[%s152 + $0x1e8] sm:$0xff]
        %v240 = vld [vmem:[%s152 + $0x1f0] sm:$0xff]
        %v241 = vld [vmem:[%s152 + $0x1f8] sm:$0xff]
        %v242 = vld [vmem:[%s152 + $0x200] sm:$0xff]
        %v243 = vld [vmem:[%s152 + $0x208] sm:$0xff]
        %v244 = vld [vmem:[%s152 + $0x210] sm:$0xff]
        %v245 = vld [vmem:[%s152 + $0x218] sm:$0xff]
        %v246 = vld [vmem:[%s152 + $0x220] sm:$0xff]
        %v247 = vld [vmem:[%s152 + $0x228] sm:$0xff]
        %v248 = vld [vmem:[%s152 + $0x230] sm:$0xff]
        %v249 = vld [vmem:[%s152 + $0x238] sm:$0xff]
        %v250 = vld [vmem:[%s152 + $0x240] sm:$0xff]
        %v251 = vld [vmem:[%s152 + $0x248] sm:$0xff]
        %v252 = vld [vmem:[%s152 + $0x250] sm:$0xff]
        %v253 = vld [vmem:[%s152 + $0x258] sm:$0xff]
        %v254 = vld [vmem:[%s152 + $0x260] sm:$0xff]
        %v255 = vld [vmem:[%s152 + $0x268] sm:$0xff]
        %v256 = vld [vmem:[%s152 + $0x270] sm:$0xff]
        %v257 = vld [vmem:[%s152 + $0x278] sm:$0xff]
        %v258 = vld [vmem:[%s152 + $0x280] sm:$0xff]
        %v259 = vld [vmem:[%s152 + $0x288] sm:$0xff]
        %v260 = vld [vmem:[%s152 + $0x290] sm:$0xff]
        %v261 = vld [vmem:[%s152 + $0x298] sm:$0xff]
        %v262 = vld [vmem:[%s152 + $0x2a0] sm:$0xff]
        %v263 = vld [vmem:[%s152 + $0x2a8] sm:$0xff]
        %v264 = vld [vmem:[%s152 + $0x2b0] sm:$0xff]
        %v265 = vld [vmem:[%s152 + $0x2b8] sm:$0xff]
        %v266 = vld [vmem:[%s152 + $0x2c0] sm:$0xff]
        %v267 = vld [vmem:[%s152 + $0x2c8] sm:$0xff]
        %v268 = vld [vmem:[%s152 + $0x2d0] sm:$0xff]
        %v269 = vld [vmem:[%s152 + $0x2d8] sm:$0xff]
        %v270 = vld [vmem:[%s152 + $0x2e0] sm:$0xff]
        %v271 = vld [vmem:[%s152 + $0x2e8] sm:$0xff]
        %v272 = vld [vmem:[%s152 + $0x2f0] sm:$0xff]
        %v273 = vld [vmem:[%s152 + $0x2f8] sm:$0xff]
        %v274 = vstv %s176
        %v275 = vmul.f32 %v178, %v274
        %v276 = vmul.f32 %v179, %v274
        %v277 = vmul.f32 %v180, %v274
        %v278 = vmul.f32 %v181, %v274
        %v279 = vmul.f32 %v182, %v274
        %v280 = vmul.f32 %v183, %v274
        %v281 = vmul.f32 %v184, %v274
        %v282 = vmul.f32 %v185, %v274
        %v283 = vmul.f32 %v186, %v274
        %v284 = vmul.f32 %v187, %v274
        %v285 = vmul.f32 %v188, %v274
        %v286 = vmul.f32 %v189, %v274
        %v287 = vmul.f32 %v190, %v274
        %v288 = vmul.f32 %v191, %v274
        %v289 = vmul.f32 %v192, %v274
        %v290 = vmul.f32 %v193, %v274
        %v291 = vmul.f32 %v194, %v274
        %v292 = vmul.f32 %v195, %v274
        %v293 = vmul.f32 %v196, %v274
        %v294 = vmul.f32 %v197, %v274
        %v295 = vmul.f32 %v198, %v274
        %v296 = vmul.f32 %v199, %v274
        %v297 = vmul.f32 %v200, %v274
        %v298 = vmul.f32 %v201, %v274
        %v299 = vmul.f32 %v202, %v274
        %v300 = vmul.f32 %v203, %v274
        %v301 = vmul.f32 %v204, %v274
        %v302 = vmul.f32 %v205, %v274
        %v303 = vmul.f32 %v206, %v274
        %v304 = vmul.f32 %v207, %v274
        %v305 = vmul.f32 %v208, %v274
        %v306 = vmul.f32 %v209, %v274
        %v307 = vmul.f32 %v210, %v274
        %v308 = vmul.f32 %v211, %v274
        %v309 = vmul.f32 %v212, %v274
        %v310 = vmul.f32 %v213, %v274
        %v311 = vmul.f32 %v214, %v274
        %v312 = vmul.f32 %v215, %v274
        %v313 = vmul.f32 %v216, %v274
        %v314 = vmul.f32 %v217, %v274
        %v315 = vmul.f32 %v218, %v274
        %v316 = vmul.f32 %v219, %v274
        %v317 = vmul.f32 %v220, %v274
        %v318 = vmul.f32 %v221, %v274
        %v319 = vmul.f32 %v222, %v274
        %v320 = vmul.f32 %v223, %v274
        %v321 = vmul.f32 %v224, %v274
        %v322 = vmul.f32 %v225, %v274
        %v323 = vmul.f32 %v226, %v274
        %v324 = vmul.f32 %v227, %v274
        %v325 = vmul.f32 %v228, %v274
        %v326 = vmul.f32 %v229, %v274
        %v327 = vmul.f32 %v230, %v274
        %v328 = vmul.f32 %v231, %v274
        %v329 = vmul.f32 %v232, %v274
        %v330 = vmul.f32 %v233, %v274
        %v331 = vmul.f32 %v234, %v274
        %v332 = vmul.f32 %v235, %v274
        %v333 = vmul.f32 %v236, %v274
        %v334 = vmul.f32 %v237, %v274
        %v335 = vmul.f32 %v238, %v274
        %v336 = vmul.f32 %v239, %v274
        %v337 = vmul.f32 %v240, %v274
        %v338 = vmul.f32 %v241, %v274
        %v339 = vmul.f32 %v242, %v274
        %v340 = vmul.f32 %v243, %v274
        %v341 = vmul.f32 %v244, %v274
        %v342 = vmul.f32 %v245, %v274
        %v343 = vmul.f32 %v246, %v274
        %v344 = vmul.f32 %v247, %v274
        %v345 = vmul.f32 %v248, %v274
        %v346 = vmul.f32 %v249, %v274
        %v347 = vmul.f32 %v250, %v274
        %v348 = vmul.f32 %v251, %v274
        %v349 = vmul.f32 %v252, %v274
        %v350 = vmul.f32 %v253, %v274
        %v351 = vmul.f32 %v254, %v274
        %v352 = vmul.f32 %v255, %v274
        %v353 = vmul.f32 %v256, %v274
        %v354 = vmul.f32 %v257, %v274
        %v355 = vmul.f32 %v258, %v274
        %v356 = vmul.f32 %v259, %v274
        %v357 = vmul.f32 %v260, %v274
        %v358 = vmul.f32 %v261, %v274
        %v359 = vmul.f32 %v262, %v274
        %v360 = vmul.f32 %v263, %v274
        %v361 = vmul.f32 %v264, %v274
        %v362 = vmul.f32 %v265, %v274
        %v363 = vmul.f32 %v266, %v274
        %v364 = vmul.f32 %v267, %v274
        %v365 = vmul.f32 %v268, %v274
        %v366 = vmul.f32 %v269, %v274
        %v367 = vmul.f32 %v270, %v274
        %v368 = vmul.f32 %v271, %v274
        %v369 = vmul.f32 %v272, %v274
        %v370 = vmul.f32 %v273, %v274
        %v371 = vstv %s177
        %v372 = vadd.f32 %v275, %v371
        %v373 = vadd.f32 %v276, %v371
        %v374 = vadd.f32 %v277, %v371
        %v375 = vadd.f32 %v278, %v371
        %v376 = vadd.f32 %v279, %v371
        %v377 = vadd.f32 %v280, %v371
        %v378 = vadd.f32 %v281, %v371
        %v379 = vadd.f32 %v282, %v371
        %v380 = vadd.f32 %v283, %v371
        %v381 = vadd.f32 %v284, %v371
        %v382 = vadd.f32 %v285, %v371
        %v383 = vadd.f32 %v286, %v371
        %v384 = vadd.f32 %v287, %v371
        %v385 = vadd.f32 %v288, %v371
        %v386 = vadd.f32 %v289, %v371
        %v387 = vadd.f32 %v290, %v371
        %v388 = vadd.f32 %v291, %v371
        %v389 = vadd.f32 %v292, %v371
        %v390 = vadd.f32 %v293, %v371
        %v391 = vadd.f32 %v294, %v371
        %v392 = vadd.f32 %v295, %v371
        %v393 = vadd.f32 %v296, %v371
        %v394 = vadd.f32 %v297, %v371
        %v395 = vadd.f32 %v298, %v371
        %v396 = vadd.f32 %v299, %v371
        %v397 = vadd.f32 %v300, %v371
        %v398 = vadd.f32 %v301, %v371
        %v399 = vadd.f32 %v302, %v371
        %v400 = vadd.f32 %v303, %v371
        %v401 = vadd.f32 %v304, %v371
        %v402 = vadd.f32 %v305, %v371
        %v403 = vadd.f32 %v306, %v371
        %v404 = vadd.f32 %v307, %v371
        %v405 = vadd.f32 %v308, %v371
        %v406 = vadd.f32 %v309, %v371
        %v407 = vadd.f32 %v310, %v371
        %v408 = vadd.f32 %v311, %v371
        %v409 = vadd.f32 %v312, %v371
        %v410 = vadd.f32 %v313, %v371
        %v411 = vadd.f32 %v314, %v371
        %v412 = vadd.f32 %v315, %v371
        %v413 = vadd.f32 %v316, %v371
        %v414 = vadd.f32 %v317, %v371
        %v415 = vadd.f32 %v318, %v371
        %v416 = vadd.f32 %v319, %v371
        %v417 = vadd.f32 %v320, %v371
        %v418 = vadd.f32 %v321, %v371
        %v419 = vadd.f32 %v322, %v371
        %v420 = vadd.f32 %v323, %v371
        %v421 = vadd.f32 %v324, %v371
        %v422 = vadd.f32 %v325, %v371
        %v423 = vadd.f32 %v326, %v371
        %v424 = vadd.f32 %v327, %v371
        %v425 = vadd.f32 %v328, %v371
        %v426 = vadd.f32 %v329, %v371
        %v427 = vadd.f32 %v330, %v371
        %v428 = vadd.f32 %v331, %v371
        %v429 = vadd.f32 %v332, %v371
        %v430 = vadd.f32 %v333, %v371
        %v431 = vadd.f32 %v334, %v371
        %v432 = vadd.f32 %v335, %v371
        %v433 = vadd.f32 %v336, %v371
        %v434 = vadd.f32 %v337, %v371
        %v435 = vadd.f32 %v338, %v371
        %v436 = vadd.f32 %v339, %v371
        %v437 = vadd.f32 %v340, %v371
        %v438 = vadd.f32 %v341, %v371
        %v439 = vadd.f32 %v342, %v371
        %v440 = vadd.f32 %v343, %v371
        %v441 = vadd.f32 %v344, %v371
        %v442 = vadd.f32 %v345, %v371
        %v443 = vadd.f32 %v346, %v371
        %v444 = vadd.f32 %v347, %v371
        %v445 = vadd.f32 %v348, %v371
        %v446 = vadd.f32 %v349, %v371
        %v447 = vadd.f32 %v350, %v371
        %v448 = vadd.f32 %v351, %v371
        %v449 = vadd.f32 %v352, %v371
        %v450 = vadd.f32 %v353, %v371
        %v451 = vadd.f32 %v354, %v371
        %v452 = vadd.f32 %v355, %v371
        %v453 = vadd.f32 %v356, %v371
        %v454 = vadd.f32 %v357, %v371
        %v455 = vadd.f32 %v358, %v371
        %v456 = vadd.f32 %v359, %v371
        %v457 = vadd.f32 %v360, %v371
        %v458 = vadd.f32 %v361, %v371
        %v459 = vadd.f32 %v362, %v371
        %v460 = vadd.f32 %v363, %v371
        %v461 = vadd.f32 %v364, %v371
        %v462 = vadd.f32 %v365, %v371
        %v463 = vadd.f32 %v366, %v371
        %v464 = vadd.f32 %v367, %v371
        %v465 = vadd.f32 %v368, %v371
        %v466 = vadd.f32 %v369, %v371
        %v467 = vadd.f32 %v370, %v371
        %468 = vst [vmem:[%s173] sm:$0xff] %v372
        %469 = vst [vmem:[%s173 + $0x8] sm:$0xff] %v373
        %470 = vst [vmem:[%s173 + $0x10] sm:$0xff] %v374
        %471 = vst [vmem:[%s173 + $0x18] sm:$0xff] %v375
        %472 = vst [vmem:[%s173 + $0x20] sm:$0xff] %v376
        %473 = vst [vmem:[%s173 + $0x28] sm:$0xff] %v377
        %474 = vst [vmem:[%s173 + $0x30] sm:$0xff] %v378
        %475 = vst [vmem:[%s173 + $0x38] sm:$0xff] %v379
        %476 = vst [vmem:[%s173 + $0x40] sm:$0xff] %v380
        %477 = vst [vmem:[%s173 + $0x48] sm:$0xff] %v381
        %478 = vst [vmem:[%s173 + $0x50] sm:$0xff] %v382
        %479 = vst [vmem:[%s173 + $0x58] sm:$0xff] %v383
        %480 = vst [vmem:[%s173 + $0x60] sm:$0xff] %v384
        %481 = vst [vmem:[%s173 + $0x68] sm:$0xff] %v385
        %482 = vst [vmem:[%s173 + $0x70] sm:$0xff] %v386
        %483 = vst [vmem:[%s173 + $0x78] sm:$0xff] %v387
        %484 = vst [vmem:[%s173 + $0x80] sm:$0xff] %v388
        %485 = vst [vmem:[%s173 + $0x88] sm:$0xff] %v389
        %486 = vst [vmem:[%s173 + $0x90] sm:$0xff] %v390
        %487 = vst [vmem:[%s173 + $0x98] sm:$0xff] %v391
        %488 = vst [vmem:[%s173 + $0xa0] sm:$0xff] %v392
        %489 = vst [vmem:[%s173 + $0xa8] sm:$0xff] %v393
        %490 = vst [vmem:[%s173 + $0xb0] sm:$0xff] %v394
        %491 = vst [vmem:[%s173 + $0xb8] sm:$0xff] %v395
        %492 = vst [vmem:[%s173 + $0xc0] sm:$0xff] %v396
        %493 = vst [vmem:[%s173 + $0xc8] sm:$0xff] %v397
        %494 = vst [vmem:[%s173 + $0xd0] sm:$0xff] %v398
        %495 = vst [vmem:[%s173 + $0xd8] sm:$0xff] %v399
        %496 = vst [vmem:[%s173 + $0xe0] sm:$0xff] %v400
        %497 = vst [vmem:[%s173 + $0xe8] sm:$0xff] %v401
        %498 = vst [vmem:[%s173 + $0xf0] sm:$0xff] %v402
        %499 = vst [vmem:[%s173 + $0xf8] sm:$0xff] %v403
        %500 = vst [vmem:[%s173 + $0x100] sm:$0xff] %v404
        %501 = vst [vmem:[%s173 + $0x108] sm:$0xff] %v405
        %502 = vst [vmem:[%s173 + $0x110] sm:$0xff] %v406
        %503 = vst [vmem:[%s173 + $0x118] sm:$0xff] %v407
        %504 = vst [vmem:[%s173 + $0x120] sm:$0xff] %v408
        %505 = vst [vmem:[%s173 + $0x128] sm:$0xff] %v409
        %506 = vst [vmem:[%s173 + $0x130] sm:$0xff] %v410
        %507 = vst [vmem:[%s173 + $0x138] sm:$0xff] %v411
        %508 = vst [vmem:[%s173 + $0x140] sm:$0xff] %v412
        %509 = vst [vmem:[%s173 + $0x148] sm:$0xff] %v413
        %510 = vst [vmem:[%s173 + $0x150] sm:$0xff] %v414
        %511 = vst [vmem:[%s173 + $0x158] sm:$0xff] %v415
        %512 = vst [vmem:[%s173 + $0x160] sm:$0xff] %v416
        %513 = vst [vmem:[%s173 + $0x168] sm:$0xff] %v417
        %514 = vst [vmem:[%s173 + $0x170] sm:$0xff] %v418
        %515 = vst [vmem:[%s173 + $0x178] sm:$0xff] %v419
        %516 = vst [vmem:[%s173 + $0x180] sm:$0xff] %v420
        %517 = vst [vmem:[%s173 + $0x188] sm:$0xff] %v421
        %518 = vst [vmem:[%s173 + $0x190] sm:$0xff] %v422
        %519 = vst [vmem:[%s173 + $0x198] sm:$0xff] %v423
        %520 = vst [vmem:[%s173 + $0x1a0] sm:$0xff] %v424
        %521 = vst [vmem:[%s173 + $0x1a8] sm:$0xff] %v425
        %522 = vst [vmem:[%s173 + $0x1b0] sm:$0xff] %v426
        %523 = vst [vmem:[%s173 + $0x1b8] sm:$0xff] %v427
        %524 = vst [vmem:[%s173 + $0x1c0] sm:$0xff] %v428
        %525 = vst [vmem:[%s173 + $0x1c8] sm:$0xff] %v429
        %526 = vst [vmem:[%s173 + $0x1d0] sm:$0xff] %v430
        %527 = vst [vmem:[%s173 + $0x1d8] sm:$0xff] %v431
        %528 = vst [vmem:[%s173 + $0x1e0] sm:$0xff] %v432
        %529 = vst [vmem:[%s173 + $0x1e8] sm:$0xff] %v433
        %530 = vst [vmem:[%s173 + $0x1f0] sm:$0xff] %v434
        %531 = vst [vmem:[%s173 + $0x1f8] sm:$0xff] %v435
        %532 = vst [vmem:[%s173 + $0x200] sm:$0xff] %v436
        %533 = vst [vmem:[%s173 + $0x208] sm:$0xff] %v437
        %534 = vst [vmem:[%s173 + $0x210] sm:$0xff] %v438
        %535 = vst [vmem:[%s173 + $0x218] sm:$0xff] %v439
        %536 = vst [vmem:[%s173 + $0x220] sm:$0xff] %v440
        %537 = vst [vmem:[%s173 + $0x228] sm:$0xff] %v441
        %538 = vst [vmem:[%s173 + $0x230] sm:$0xff] %v442
        %539 = vst [vmem:[%s173 + $0x238] sm:$0xff] %v443
        %540 = vst [vmem:[%s173 + $0x240] sm:$0xff] %v444
        %541 = vst [vmem:[%s173 + $0x248] sm:$0xff] %v445
        %542 = vst [vmem:[%s173 + $0x250] sm:$0xff] %v446
        %543 = vst [vmem:[%s173 + $0x258] sm:$0xff] %v447
        %544 = vst [vmem:[%s173 + $0x260] sm:$0xff] %v448
        %545 = vst [vmem:[%s173 + $0x268] sm:$0xff] %v449
        %546 = vst [vmem:[%s173 + $0x270] sm:$0xff] %v450
        %547 = vst [vmem:[%s173 + $0x278] sm:$0xff] %v451
        %548 = vst [vmem:[%s173 + $0x280] sm:$0xff] %v452
        %549 = vst [vmem:[%s173 + $0x288] sm:$0xff] %v453
        %550 = vst [vmem:[%s173 + $0x290] sm:$0xff] %v454
        %551 = vst [vmem:[%s173 + $0x298] sm:$0xff] %v455
        %552 = vst [vmem:[%s173 + $0x2a0] sm:$0xff] %v456
        %553 = vst [vmem:[%s173 + $0x2a8] sm:$0xff] %v457
        %554 = vst [vmem:[%s173 + $0x2b0] sm:$0xff] %v458
        %555 = vst [vmem:[%s173 + $0x2b8] sm:$0xff] %v459
        %556 = vst [vmem:[%s173 + $0x2c0] sm:$0xff] %v460
        %557 = vst [vmem:[%s173 + $0x2c8] sm:$0xff] %v461
        %558 = vst [vmem:[%s173 + $0x2d0] sm:$0xff] %v462
        %559 = vst [vmem:[%s173 + $0x2d8] sm:$0xff] %v463
        %560 = vst [vmem:[%s173 + $0x2e0] sm:$0xff] %v464
        %561 = vst [vmem:[%s173 + $0x2e8] sm:$0xff] %v465
        %562 = vst [vmem:[%s173 + $0x2f0] sm:$0xff] %v466
        %563 = vst [vmem:[%s173 + $0x2f8] sm:$0xff] %v467
        %s564 = sand.u32 %s75, 1
        %s565 = scalar_lea.sflag [#allocation4], %s564
        %s566 = sand.u32 %s75, 1
        %s567 = smul.addr %s566, 768
        %s568 = scalar_lea.vmem [#allocation7], %s567
        // Predicated region
        $region37: #{tpu_custom_call.1} parent=27 // pred_check
          %p569 = pneg %p85
        $region38: #{tpu_custom_call.1} parent=27 // pred_check_branch
          %571 = sbr.rel (%p569) target = $region40
        $region39: #{tpu_custom_call.1} parent=27 // pred_region
          %s572 = smul.u32 96, %s20
          %s574 = ssub.s32 12288, 12288
          %575 = vsyncadd %s565, %s574
          %s576 = smul.addr %s572, 128
          %s577 = scalar_lea.hbm %s2, %s576
          %s578 = sshll.u32 %s568, 4
          %s579 = int_to_ptr.vmem [resolvable:$true] %s578
          %584 = dma.vmem_to_hbm [thread:$0]  %s579, 12288, %s577, %s565, 128, 128, 8
        $region40: #{tpu_custom_call.1} parent=27 // pred_fallthru
          _
      $region28: #{tpu_custom_call.1} parent=5 // pred_fallthru
        _
      %p585 = scmp.le.s32.totalorder 2, %s15
      // Predicated region
      $region41: #{tpu_custom_call.1} parent=5 // pred_check
        %p586 = pneg %p585
      $region42: #{tpu_custom_call.1} parent=5 // pred_check_branch
        %588 = sbr.rel (%p586) target = $region44
      $region43: #{tpu_custom_call.1} parent=5 // pred_region
        %s589 = ssub.s32 %s15, 2
        // Predicated region
        $region45: #{tpu_custom_call.1} parent=43 // pred_check
          %p590 = pneg %p91
        $region46: #{tpu_custom_call.1} parent=43 // pred_check_branch
          %592 = sbr.rel (%p590) target = $region48
        $region47: #{tpu_custom_call.1} parent=43 // pred_region
          %s593 = sand.u32 %s76, 1
          %s594 = scalar_lea.sflag [#allocation4], %s593
          %s595 = sand.u32 %s76, 1
          %s596 = smul.addr %s595, 768
          %s597 = scalar_lea.vmem [#allocation7], %s596
          %598 = dma.done %s594, 12288
        $region48: #{tpu_custom_call.1} parent=43 // pred_fallthru
          _
      $region44: #{tpu_custom_call.1} parent=5 // pred_fallthru
        _
    $region6: #{tpu_custom_call.1} parent=1 // loop_footer
      %s19 = sadd.s32 1, %s15
    $region7: #{tpu_custom_call.1} parent=1 // loop_footer_branch
      %14 = sbr.rel target = $region3
    $region8: #{tpu_custom_call.1} parent=1 // loop_exit
      _
    %599 = vsyncpa [#allocation3], 1
    %s600 = scalar_lea.sflag [#allocation3], 1
    %601 = vsyncpa %s600, 1
    %602 = vsyncpa [#allocation4], 1
    %s603 = scalar_lea.sflag [#allocation4], 1
    %604 = vsyncpa %s603, 1
    %605 = vsyncpa [#allocation5], 1
    %s606 = scalar_lea.sflag [#allocation5], 1
    %607 = vsyncpa %s606, 1

</llo_original>
